<compile_context>
chip_gen: v5e
topology: v5e:2x2
jax: 0.10.0
libtpu: 0.0.40
codegen_flags: <defaults>
</compile_context>

<pallas_src>
import jax
import jax.numpy as jnp
from jax.experimental import pallas as pl
from jax.experimental.pallas import tpu as pltpu

COND_FEATURES = ["Age", "Gender", "disease_label"]
LATENT_DIM = 100
TABULAR_FEATURES = ["Age", "Gender", "Height", "Weight", "ICUType", "Outcome"]

COND_DIM = len(COND_FEATURES)          # 3
IN_DIM = LATENT_DIM + COND_DIM         # 103
H1 = 256
H2 = 128
OUT_DIM = len(TABULAR_FEATURES)        # 6
OUT_PAD = 128                          # lane-dense padded output width


def _mlp_kernel(z_ref, c_ref, w1z_ref, w1c_ref, w2_ref, w3_ref, b_ref, o_ref):
    # MXU inputs in bf16, f32 accumulation; elementwise math stays f32.
    zb = z_ref[...].astype(jnp.bfloat16)
    cb = c_ref[...].astype(jnp.bfloat16)

    b1 = b_ref[:, 0:H1]                        # (1, 256)
    b2 = b_ref[:, H1:H1 + H2]                  # (1, 128)
    b3 = b_ref[:, H1 + H2:H1 + H2 + OUT_PAD]   # (1, 128); cols >= OUT_DIM are 0

    # Layer 1: Linear(103 -> 256) + ReLU, concat fused as two matmuls.
    h1 = (jnp.dot(zb, w1z_ref[...], preferred_element_type=jnp.float32)
          + jnp.dot(cb, w1c_ref[...], preferred_element_type=jnp.float32)
          + b1)
    h1 = jnp.maximum(h1, 0.0)

    # Layer 2: Linear(256 -> 128) + ReLU.
    h2 = jnp.dot(h1.astype(jnp.bfloat16), w2_ref[...],
                 preferred_element_type=jnp.float32) + b2
    h2 = jnp.maximum(h2, 0.0)

    # Layer 3: Linear(128 -> 6, zero-padded to 128) + Sigmoid.
    logits = jnp.dot(h2.astype(jnp.bfloat16), w3_ref[...],
                     preferred_element_type=jnp.float32) + b3
    o_ref[...] = jax.nn.sigmoid(logits).astype(o_ref.dtype)


def tabular_generator_forward(z, cond, params, *, batch_tile=64):
    """z: (B, 100), cond: (B, 3) -> (B, 6) float32 in [0, 1]."""
    w1z, w1c, w2, w3p, biases = params
    B = z.shape[0]
    if batch_tile > B or B % batch_tile != 0:
        batch_tile = B  # single batch tile for small / ragged batches
    grid = (B // batch_tile,)

    z = z.astype(jnp.float32)
    cond = cond.astype(jnp.float32)

    row = lambda shape: pl.BlockSpec(shape, lambda i: (i, 0))   # batch-tiled
    rep = lambda shape: pl.BlockSpec(shape, lambda i: (0, 0))   # replicated

    out_padded = pl.pallas_call(
        _mlp_kernel,
        out_shape=jax.ShapeDtypeStruct((B, OUT_PAD), jnp.float32),
        grid=grid,
        in_specs=[
            row((batch_tile, LATENT_DIM)),        # z
            row((batch_tile, COND_DIM)),          # cond
            rep((LATENT_DIM, H1)),                # w1_z (bf16)
            rep((COND_DIM, H1)),                  # w1_c (bf16)
            rep((H1, H2)),                        # w2   (bf16)
            rep((H2, OUT_PAD)),                   # w3   (bf16, zero-padded cols)
            rep((1, H1 + H2 + OUT_PAD)),          # packed biases (f32)
        ],
        out_specs=row((batch_tile, OUT_PAD)),
        compiler_params=pltpu.CompilerParams(
            dimension_semantics=("parallel",),    # v7x: split batch across TCs
        ),
    )(z, cond, w1z, w1c, w2, w3p, biases)

    # Drop the zero-padded output columns (padded sigmoid(0)=0.5 never leaks).
    return out_padded[:, :OUT_DIM]


def init_params(key):
    """Mimics nn.Linear's U(-1/sqrt(fan_in), 1/sqrt(fan_in)) init.

    Weights are laid out (in_features, out_features) [transpose of PyTorch's
    nn.Linear weight] and stored in bf16; w1 is split into z/cond halves, w3 is
    zero-padded to OUT_PAD columns, and the biases are packed into one f32 row.
    """
    ks = jax.random.split(key, 6)

    def linear(kw, kb, fan_in, fan_out):
        bound = 1.0 / jnp.sqrt(jnp.float32(fan_in))
        w = jax.random.uniform(kw, (fan_in, fan_out), jnp.float32, -bound, bound)
        b = jax.random.uniform(kb, (1, fan_out), jnp.float32, -bound, bound)
        return w, b

    w1, b1 = linear(ks[0], ks[1], IN_DIM, H1)
    w2, b2 = linear(ks[2], ks[3], H1, H2)
    w3, b3 = linear(ks[4], ks[5], H2, OUT_DIM)

    w1z = w1[:LATENT_DIM].astype(jnp.bfloat16)
    w1c = w1[LATENT_DIM:].astype(jnp.bfloat16)
    w2b = w2.astype(jnp.bfloat16)
    w3p = jnp.pad(w3, ((0, 0), (0, OUT_PAD - OUT_DIM))).astype(jnp.bfloat16)
    b3p = jnp.pad(b3, ((0, 0), (0, OUT_PAD - OUT_DIM)))
    biases = jnp.concatenate([b1, b2, b3p], axis=1)   # (1, 512) f32
    return (w1z, w1c, w2b, w3p, biases)


def _reference(z, cond, params):
    """Plain-JAX reference with the same bf16-weight / bf16-MXU-input math."""
    w1z, w1c, w2, w3p, biases = params
    b1 = biases[:, :H1]
    b2 = biases[:, H1:H1 + H2]
    b3 = biases[:, H1 + H2:H1 + H2 + OUT_DIM]
    zb = z.astype(jnp.bfloat16)
    cb = cond.astype(jnp.bfloat16)
    h1 = jnp.maximum(
        jnp.dot(zb, w1z, preferred_element_type=jnp.float32)
        + jnp.dot(cb, w1c, preferred_element_type=jnp.float32) + b1, 0.0)
    h2 = jnp.maximum(
        jnp.dot(h1.astype(jnp.bfloat16), w2,
                preferred_element_type=jnp.float32) + b2, 0.0)
    logits = jnp.dot(h2.astype(jnp.bfloat16), w3p[:, :OUT_DIM],
                     preferred_element_type=jnp.float32) + b3
    return jax.nn.sigmoid(logits)


if __name__ == "__main__":
    key = jax.random.PRNGKey(0)
    k_params, k_z, k_c = jax.random.split(key, 3)

    # Batch many samples per call (B >= 128, multiple of 8) so dispatch and
    # weight-DMA overhead are amortized and the batch grid can be split.
    B = 128
    params = init_params(k_params)
    z = jax.random.normal(k_z, (B, LATENT_DIM), jnp.float32)
    cond = jax.random.uniform(k_c, (B, COND_DIM), jnp.float32)

    out = tabular_generator_forward(z, cond, params, batch_tile=64)
    out = jax.block_until_ready(out)

    ref = _reference(z, cond, params)
    assert out.shape == (B, OUT_DIM)
    assert bool(jnp.all((out >= 0.0) & (out <= 1.0)))
    assert jnp.allclose(out, ref, atol=1e-4, rtol=1e-4), float(
        jnp.max(jnp.abs(out - ref)))

    print("KERNEL_OK")
</pallas_src>

<mosaic_0001>
module attributes {stable_mosaic.version = 11 : i64} {
  func.func @_mlp_kernel(%arg0: i32, %arg1: memref<64x100xf32, #tpu.memory_space<vmem>>, %arg2: memref<64x3xf32, #tpu.memory_space<vmem>>, %arg3: memref<100x256xbf16, #tpu.memory_space<vmem>>, %arg4: memref<3x256xbf16, #tpu.memory_space<vmem>>, %arg5: memref<256x128xbf16, #tpu.memory_space<vmem>>, %arg6: memref<128x128xbf16, #tpu.memory_space<vmem>>, %arg7: memref<1x512xf32, #tpu.memory_space<vmem>>, %arg8: memref<64x128xf32, #tpu.memory_space<vmem>>) attributes {dimension_semantics = [#tpu.dimension_semantics<parallel>], iteration_bounds = array<i64: 2>, scalar_prefetch = 0 : i64, scratch_operands = 0 : i64, tpu.core_type = #tpu.core_type<tc>, window_params = [{transform_indices = @transform_0, window_bounds = array<i64: 64, 100>}, {transform_indices = @transform_1, window_bounds = array<i64: 64, 3>}, {pipeline_mode = #tpu.pipeline_mode<synchronous>, transform_indices = @transform_2, window_bounds = array<i64: 100, 256>}, {pipeline_mode = #tpu.pipeline_mode<synchronous>, transform_indices = @transform_3, window_bounds = array<i64: 3, 256>}, {pipeline_mode = #tpu.pipeline_mode<synchronous>, transform_indices = @transform_4, window_bounds = array<i64: 256, 128>}, {pipeline_mode = #tpu.pipeline_mode<synchronous>, transform_indices = @transform_5, window_bounds = array<i64: 128, 128>}, {pipeline_mode = #tpu.pipeline_mode<synchronous>, transform_indices = @transform_6, window_bounds = array<i64: 1, 512>}, {transform_indices = @transform_7, window_bounds = array<i64: 64, 128>}]} {
    %c0 = arith.constant 0 : index
    %c0_0 = arith.constant 0 : index
    %0 = vector.load %arg1[%c0, %c0_0] : memref<64x100xf32, #tpu.memory_space<vmem>>, vector<64x100xf32>
    %1 = arith.truncf %0 : vector<64x100xf32> to vector<64x100xbf16>
    %c0_1 = arith.constant 0 : index
    %c0_2 = arith.constant 0 : index
    %2 = vector.load %arg2[%c0_1, %c0_2] : memref<64x3xf32, #tpu.memory_space<vmem>>, vector<64x3xf32>
    %3 = arith.truncf %2 : vector<64x3xf32> to vector<64x3xbf16>
    %c0_3 = arith.constant 0 : index
    %c0_4 = arith.constant 0 : index
    %4 = vector.load %arg7[%c0_3, %c0_4] : memref<1x512xf32, #tpu.memory_space<vmem>>, vector<1x256xf32>
    %c0_5 = arith.constant 0 : index
    %c256 = arith.constant 256 : index
    %5 = vector.load %arg7[%c0_5, %c256] : memref<1x512xf32, #tpu.memory_space<vmem>>, vector<1x128xf32>
    %c0_6 = arith.constant 0 : index
    %c384 = arith.constant 384 : index
    %6 = vector.load %arg7[%c0_6, %c384] : memref<1x512xf32, #tpu.memory_space<vmem>>, vector<1x128xf32>
    %c0_7 = arith.constant 0 : index
    %c0_8 = arith.constant 0 : index
    %7 = vector.load %arg3[%c0_7, %c0_8] : memref<100x256xbf16, #tpu.memory_space<vmem>>, vector<100x256xbf16>
    %cst = arith.constant dense<0.000000e+00> : vector<64x256xf32>
    %8 = tpu.matmul %1, %7, %cst {dimension_numbers = #tpu.dot_dimension_numbers<[1], [0], [0], [1], [0, 0, 1, 1], [], []>} : vector<64x100xbf16>, vector<100x256xbf16>, vector<64x256xf32> -> vector<64x256xf32>
    %c0_9 = arith.constant 0 : index
    %c0_10 = arith.constant 0 : index
    %9 = vector.load %arg4[%c0_9, %c0_10] : memref<3x256xbf16, #tpu.memory_space<vmem>>, vector<3x256xbf16>
    %cst_11 = arith.constant dense<0.000000e+00> : vector<64x256xf32>
    %10 = tpu.matmul %3, %9, %cst_11 {dimension_numbers = #tpu.dot_dimension_numbers<[1], [0], [0], [1], [0, 0, 1, 1], [], []>} : vector<64x3xbf16>, vector<3x256xbf16>, vector<64x256xf32> -> vector<64x256xf32>
    %11 = arith.addf %8, %10 : vector<64x256xf32>
    %12 = vector.broadcast %4 : vector<1x256xf32> to vector<64x256xf32>
    %13 = arith.addf %11, %12 : vector<64x256xf32>
    %cst_12 = arith.constant 0.000000e+00 : f32
    %14 = vector.broadcast %cst_12 : f32 to vector<64x256xf32>
    %15 = arith.maximumf %13, %14 : vector<64x256xf32>
    %16 = arith.truncf %15 : vector<64x256xf32> to vector<64x256xbf16>
    %c0_13 = arith.constant 0 : index
    %c0_14 = arith.constant 0 : index
    %17 = vector.load %arg5[%c0_13, %c0_14] : memref<256x128xbf16, #tpu.memory_space<vmem>>, vector<256x128xbf16>
    %cst_15 = arith.constant dense<0.000000e+00> : vector<64x128xf32>
    %18 = tpu.matmul %16, %17, %cst_15 {dimension_numbers = #tpu.dot_dimension_numbers<[1], [0], [0], [1], [0, 0, 1, 1], [], []>} : vector<64x256xbf16>, vector<256x128xbf16>, vector<64x128xf32> -> vector<64x128xf32>
    %19 = vector.broadcast %5 : vector<1x128xf32> to vector<64x128xf32>
    %20 = arith.addf %18, %19 : vector<64x128xf32>
    %cst_16 = arith.constant 0.000000e+00 : f32
    %21 = vector.broadcast %cst_16 : f32 to vector<64x128xf32>
    %22 = arith.maximumf %20, %21 : vector<64x128xf32>
    %23 = arith.truncf %22 : vector<64x128xf32> to vector<64x128xbf16>
    %c0_17 = arith.constant 0 : index
    %c0_18 = arith.constant 0 : index
    %24 = vector.load %arg6[%c0_17, %c0_18] : memref<128x128xbf16, #tpu.memory_space<vmem>>, vector<128x128xbf16>
    %cst_19 = arith.constant dense<0.000000e+00> : vector<64x128xf32>
    %25 = tpu.matmul %23, %24, %cst_19 {dimension_numbers = #tpu.dot_dimension_numbers<[1], [0], [0], [1], [0, 0, 1, 1], [], []>} : vector<64x128xbf16>, vector<128x128xbf16>, vector<64x128xf32> -> vector<64x128xf32>
    %26 = vector.broadcast %6 : vector<1x128xf32> to vector<64x128xf32>
    %27 = arith.addf %25, %26 : vector<64x128xf32>
    %28 = arith.negf %27 : vector<64x128xf32>
    %29 = math.exp %28 : vector<64x128xf32>
    %cst_20 = arith.constant 1.000000e+00 : f32
    %30 = vector.broadcast %cst_20 : f32 to vector<64x128xf32>
    %31 = arith.addf %30, %29 : vector<64x128xf32>
    %32 = arith.divf %30, %31 : vector<64x128xf32>
    %c0_21 = arith.constant 0 : index
    %c0_22 = arith.constant 0 : index
    %33 = vector.load %arg8[%c0_21, %c0_22] : memref<64x128xf32, #tpu.memory_space<vmem>>, vector<64x128xf32>
    tpu.vector_store %arg8[%c0_21, %c0_22], %32 {strides = array<i32>} : memref<64x128xf32, #tpu.memory_space<vmem>>, vector<64x128xf32>,
    return
  }
  func.func @transform_0(%arg0: i32) -> (i32, i32) {
    %c0_i32 = arith.constant 0 : i32
    %c0_i32_0 = arith.constant 0 : i32
    return %arg0, %c0_i32 : i32, i32
  }
  func.func @transform_1(%arg0: i32) -> (i32, i32) {
    %c0_i32 = arith.constant 0 : i32
    %c0_i32_0 = arith.constant 0 : i32
    return %arg0, %c0_i32 : i32, i32
  }
  func.func @transform_2(%arg0: i32) -> (i32, i32) {
    %c0_i32 = arith.constant 0 : i32
    %c0_i32_0 = arith.constant 0 : i32
    %c0_i32_1 = arith.constant 0 : i32
    return %c0_i32, %c0_i32_0 : i32, i32
  }
  func.func @transform_3(%arg0: i32) -> (i32, i32) {
    %c0_i32 = arith.constant 0 : i32
    %c0_i32_0 = arith.constant 0 : i32
    %c0_i32_1 = arith.constant 0 : i32
    return %c0_i32, %c0_i32_0 : i32, i32
  }
  func.func @transform_4(%arg0: i32) -> (i32, i32) {
    %c0_i32 = arith.constant 0 : i32
    %c0_i32_0 = arith.constant 0 : i32
    %c0_i32_1 = arith.constant 0 : i32
    return %c0_i32, %c0_i32_0 : i32, i32
  }
  func.func @transform_5(%arg0: i32) -> (i32, i32) {
    %c0_i32 = arith.constant 0 : i32
    %c0_i32_0 = arith.constant 0 : i32
    %c0_i32_1 = arith.constant 0 : i32
    return %c0_i32, %c0_i32_0 : i32, i32
  }
  func.func @transform_6(%arg0: i32) -> (i32, i32) {
    %c0_i32 = arith.constant 0 : i32
    %c0_i32_0 = arith.constant 0 : i32
    %c0_i32_1 = arith.constant 0 : i32
    return %c0_i32, %c0_i32_0 : i32, i32
  }
  func.func @transform_7(%arg0: i32) -> (i32, i32) {
    %c0_i32 = arith.constant 0 : i32
    %c0_i32_0 = arith.constant 0 : i32
    return %arg0, %c0_i32 : i32, i32
  }
}

</mosaic_0001>

<llo_original>
// kernel: tpu_custom_call.1
$region0: #{tpu_custom_call.1}
  #allocation0 [shape = 'u32[]', space=smem, size = 0x4, offset = 0x4, fixed_abs, tag = 'smem constant byte address 0x4 - core index']
  #allocation1 [shape = 'u32[72,128]{1,0:T(1,128)}', space=vmem, size = 0x9000, scoped, tag = 'internal scratch']
  %s0 = inlined_call_operand.vmem [shape: f32[128,100], index: 0, kind: input, shape index: {}]
  %s1 = inlined_call_operand.vmem [shape: f32[128,3], index: 1, kind: input, shape index: {}]
  %s2 = inlined_call_operand.vmem [shape: bf16[100,256], index: 2, kind: input, shape index: {}]
  %s3 = inlined_call_operand.vmem [shape: bf16[3,256], index: 3, kind: input, shape index: {}]
  %s4 = inlined_call_operand.vmem [shape: bf16[256,128], index: 4, kind: input, shape index: {}]
  %s5 = inlined_call_operand.vmem [shape: bf16[128,128], index: 5, kind: input, shape index: {}]
  %s6 = inlined_call_operand.vmem [shape: f32[1,512], index: 6, kind: input, shape index: {}]
  %s7 = inlined_call_operand.hbm [shape: f32[128,128], index: 7, kind: output, shape index: {}]
  %s8 = sld [smem:[#allocation0]]
  $region61: #{tpu_custom_call.1} parent=0
    _
  %s10 = ssub.s32 1, %s8
  %s11 = scalar_select 0, %s10, %s8
  $region1: #{tpu_custom_call.1} parent=0
    #allocation2 [shape = 'u8[65536]{0}', space=vmem, size = 0x10000, scoped, tag = 'output window, operand 0']
    #allocation3 [shape = 's32[2]{0}', space=sflag, size = 0x8, scoped, tag = 'scoped memory for tpu_custom_call.1']
    %12 = vsyncpa [#allocation3], 0
    %s13 = scalar_lea.sflag [#allocation3], 1
    %14 = vsyncpa %s13, 0
    loop: start=0, step=1, limit=4
    $region2: #{tpu_custom_call.1} parent=1 // loop_pre_header
      _
    $region3: #{tpu_custom_call.1} parent=1 // loop_header
      %s16 = sphi 0, %s20
      %p17 = scmp.ge.s32.totalorder %s16, 4
      %s26 = sphi 0, %s28
      %s29 = sphi 0, %s26
      %s30 = sphi 0, %s29
      %s46 = sphi 0, %s30
      %s52 = sphi 0, %s54
      %s55 = sphi 0, %s52
      %s56 = sphi 0, %s55
      %s72 = sphi 0, %s56
      %s76 = sphi 0, %s76
      %s78 = sphi 0, %s76
      %s79 = sphi 0, %s78
      %s93 = sphi 0, %s79
      %s97 = sphi 0, %s97
      %s99 = sphi 0, %s97
      %s100 = sphi 0, %s99
      %s114 = sphi 0, %s100
      %s118 = sphi 0, %s118
      %s120 = sphi 0, %s118
      %s121 = sphi 0, %s120
      %s135 = sphi 0, %s121
      %s139 = sphi 0, %s139
      %s141 = sphi 0, %s139
      %s142 = sphi 0, %s141
      %s156 = sphi 0, %s142
      %s160 = sphi 0, %s160
      %s162 = sphi 0, %s160
      %s163 = sphi 0, %s162
      %s177 = sphi 0, %s163
      %s183 = sphi 0, %s185
      %s186 = sphi 0, %s183
      %s187 = sphi 0, %s186
      %s203 = sphi 0, %s187
    $region4: #{tpu_custom_call.1} parent=1 // loop_header_branch
      %19 = sbr.rel (%p17) target = $region8
    $region5: #{tpu_custom_call.1} parent=1 // loop_body
      %s21 = ssub.s32 %s16, 1
      %s22 = ssub.s32 %s16, 2
      %s23 = sadd.s32 %s16, 1
      %s24 = ssub.s32 %s16, %s23
      %p25 = scmp.eq.s32.totalorder %s24, 0
      %s27 = sadd.s32 %s26, 1
      %s28 = scalar_select %p25, %s26, %s27
      %p31 = pneg %p25
      %p32 = scmp.eq.s32.totalorder %s16, 1
      %p33 = por %p31, %p32
      %p34 = scmp.ne.s32.totalorder %s26, %s29
      %p35 = scmp.eq.s32.totalorder %s16, 0
      %p36 = por %p34, %p35
      %p37 = scmp.ne.s32.totalorder %s26, %s29
      %p38 = scmp.eq.s32.totalorder %s21, 1
      %p39 = por %p37, %p38
      %p40 = scmp.ne.s32.totalorder %s29, %s30
      %p41 = scmp.eq.s32.totalorder %s21, 0
      %p42 = por %p40, %p41
      %p43 = scmp.ne.s32.totalorder %s29, %s30
      %p44 = scmp.eq.s32.totalorder %s22, 1
      %p45 = por %p43, %p44
      %p47 = scmp.ne.s32.totalorder %s30, %s46
      %p48 = scmp.eq.s32.totalorder %s22, 0
      %p49 = por %p47, %p48
      %s50 = ssub.s32 %s16, %s23
      %p51 = scmp.eq.s32.totalorder %s50, 0
      %s53 = sadd.s32 %s52, 1
      %s54 = scalar_select %p51, %s52, %s53
      %p57 = pneg %p51
      %p58 = scmp.eq.s32.totalorder %s16, 1
      %p59 = por %p57, %p58
      %p60 = scmp.ne.s32.totalorder %s52, %s55
      %p61 = scmp.eq.s32.totalorder %s16, 0
      %p62 = por %p60, %p61
      %p63 = scmp.ne.s32.totalorder %s52, %s55
      %p64 = scmp.eq.s32.totalorder %s21, 1
      %p65 = por %p63, %p64
      %p66 = scmp.ne.s32.totalorder %s55, %s56
      %p67 = scmp.eq.s32.totalorder %s21, 0
      %p68 = por %p66, %p67
      %p69 = scmp.ne.s32.totalorder %s55, %s56
      %p70 = scmp.eq.s32.totalorder %s22, 1
      %p71 = por %p69, %p70
      %p73 = scmp.ne.s32.totalorder %s56, %s72
      %p74 = scmp.eq.s32.totalorder %s22, 0
      %p75 = por %p73, %p74
      %s77 = sadd.s32 %s76, 1
      %p80 = scmp.eq.s32.totalorder %s16, 1
      %p81 = scmp.ne.s32.totalorder %s76, %s78
      %p82 = scmp.eq.s32.totalorder %s16, 0
      %p83 = por %p81, %p82
      %p84 = scmp.ne.s32.totalorder %s76, %s78
      %p85 = scmp.eq.s32.totalorder %s21, 1
      %p86 = por %p84, %p85
      %p87 = scmp.ne.s32.totalorder %s78, %s79
      %p88 = scmp.eq.s32.totalorder %s21, 0
      %p89 = por %p87, %p88
      %p90 = scmp.ne.s32.totalorder %s78, %s79
      %p91 = scmp.eq.s32.totalorder %s22, 1
      %p92 = por %p90, %p91
      %p94 = scmp.ne.s32.totalorder %s79, %s93
      %p95 = scmp.eq.s32.totalorder %s22, 0
      %p96 = por %p94, %p95
      %s98 = sadd.s32 %s97, 1
      %p101 = scmp.eq.s32.totalorder %s16, 1
      %p102 = scmp.ne.s32.totalorder %s97, %s99
      %p103 = scmp.eq.s32.totalorder %s16, 0
      %p104 = por %p102, %p103
      %p105 = scmp.ne.s32.totalorder %s97, %s99
      %p106 = scmp.eq.s32.totalorder %s21, 1
      %p107 = por %p105, %p106
      %p108 = scmp.ne.s32.totalorder %s99, %s100
      %p109 = scmp.eq.s32.totalorder %s21, 0
      %p110 = por %p108, %p109
      %p111 = scmp.ne.s32.totalorder %s99, %s100
      %p112 = scmp.eq.s32.totalorder %s22, 1
      %p113 = por %p111, %p112
      %p115 = scmp.ne.s32.totalorder %s100, %s114
      %p116 = scmp.eq.s32.totalorder %s22, 0
      %p117 = por %p115, %p116
      %s119 = sadd.s32 %s118, 1
      %p122 = scmp.eq.s32.totalorder %s16, 1
      %p123 = scmp.ne.s32.totalorder %s118, %s120
      %p124 = scmp.eq.s32.totalorder %s16, 0
      %p125 = por %p123, %p124
      %p126 = scmp.ne.s32.totalorder %s118, %s120
      %p127 = scmp.eq.s32.totalorder %s21, 1
      %p128 = por %p126, %p127
      %p129 = scmp.ne.s32.totalorder %s120, %s121
      %p130 = scmp.eq.s32.totalorder %s21, 0
      %p131 = por %p129, %p130
      %p132 = scmp.ne.s32.totalorder %s120, %s121
      %p133 = scmp.eq.s32.totalorder %s22, 1
      %p134 = por %p132, %p133
      %p136 = scmp.ne.s32.totalorder %s121, %s135
      %p137 = scmp.eq.s32.totalorder %s22, 0
      %p138 = por %p136, %p137
      %s140 = sadd.s32 %s139, 1
      %p143 = scmp.eq.s32.totalorder %s16, 1
      %p144 = scmp.ne.s32.totalorder %s139, %s141
      %p145 = scmp.eq.s32.totalorder %s16, 0
      %p146 = por %p144, %p145
      %p147 = scmp.ne.s32.totalorder %s139, %s141
      %p148 = scmp.eq.s32.totalorder %s21, 1
      %p149 = por %p147, %p148
      %p150 = scmp.ne.s32.totalorder %s141, %s142
      %p151 = scmp.eq.s32.totalorder %s21, 0
      %p152 = por %p150, %p151
      %p153 = scmp.ne.s32.totalorder %s141, %s142
      %p154 = scmp.eq.s32.totalorder %s22, 1
      %p155 = por %p153, %p154
      %p157 = scmp.ne.s32.totalorder %s142, %s156
      %p158 = scmp.eq.s32.totalorder %s22, 0
      %p159 = por %p157, %p158
      %s161 = sadd.s32 %s160, 1
      %p164 = scmp.eq.s32.totalorder %s16, 1
      %p165 = scmp.ne.s32.totalorder %s160, %s162
      %p166 = scmp.eq.s32.totalorder %s16, 0
      %p167 = por %p165, %p166
      %p168 = scmp.ne.s32.totalorder %s160, %s162
      %p169 = scmp.eq.s32.totalorder %s21, 1
      %p170 = por %p168, %p169
      %p171 = scmp.ne.s32.totalorder %s162, %s163
      %p172 = scmp.eq.s32.totalorder %s21, 0
      %p173 = por %p171, %p172
      %p174 = scmp.ne.s32.totalorder %s162, %s163
      %p175 = scmp.eq.s32.totalorder %s22, 1
      %p176 = por %p174, %p175
      %p178 = scmp.ne.s32.totalorder %s163, %s177
      %p179 = scmp.eq.s32.totalorder %s22, 0
      %p180 = por %p178, %p179
      %s181 = ssub.s32 %s16, %s23
      %p182 = scmp.eq.s32.totalorder %s181, 0
      %s184 = sadd.s32 %s183, 1
      %s185 = scalar_select %p182, %s183, %s184
      %p188 = pneg %p182
      %p189 = scmp.eq.s32.totalorder %s16, 1
      %p190 = por %p188, %p189
      %p191 = scmp.ne.s32.totalorder %s183, %s186
      %p192 = scmp.eq.s32.totalorder %s16, 0
      %p193 = por %p191, %p192
      %p194 = scmp.ne.s32.totalorder %s183, %s186
      %p195 = scmp.eq.s32.totalorder %s21, 1
      %p196 = por %p194, %p195
      %p197 = scmp.ne.s32.totalorder %s186, %s187
      %p198 = scmp.eq.s32.totalorder %s21, 0
      %p199 = por %p197, %p198
      %p200 = scmp.ne.s32.totalorder %s186, %s187
      %p201 = scmp.eq.s32.totalorder %s22, 1
      %p202 = por %p200, %p201
      %p204 = scmp.ne.s32.totalorder %s187, %s203
      %p205 = scmp.eq.s32.totalorder %s22, 0
      %p206 = por %p204, %p205
      %p207 = scmp.le.s32.totalorder 1, %s16
      %p208 = scmp.lt.s32.totalorder %s16, 3
      %p209 = pnand %p207, %p208
      %p210 = pneg %p209
      // Predicated region
      $region9: #{tpu_custom_call.1} parent=5 // pred_check
        _
      $region10: #{tpu_custom_call.1} parent=5 // pred_check_branch
        %212 = sbr.rel (%p209) target = $region12
      $region11: #{tpu_custom_call.1} parent=5 // pred_region
        %s213 = ssub.s32 %s16, 1
        // Predicated region
        $region13: #{tpu_custom_call.1} parent=11 // pred_check
          %p214 = pneg %p89
        $region14: #{tpu_custom_call.1} parent=11 // pred_check_branch
          %216 = sbr.rel (%p214) target = $region16
        $region15: #{tpu_custom_call.1} parent=11 // pred_region
          _
        $region16: #{tpu_custom_call.1} parent=11 // pred_fallthru
          _
        // Predicated region
        $region17: #{tpu_custom_call.1} parent=11 // pred_check
          %p217 = pneg %p110
        $region18: #{tpu_custom_call.1} parent=11 // pred_check_branch
          %219 = sbr.rel (%p217) target = $region20
        $region19: #{tpu_custom_call.1} parent=11 // pred_region
          _
        $region20: #{tpu_custom_call.1} parent=11 // pred_fallthru
          _
        // Predicated region
        $region21: #{tpu_custom_call.1} parent=11 // pred_check
          %p220 = pneg %p131
        $region22: #{tpu_custom_call.1} parent=11 // pred_check_branch
          %222 = sbr.rel (%p220) target = $region24
        $region23: #{tpu_custom_call.1} parent=11 // pred_region
          _
        $region24: #{tpu_custom_call.1} parent=11 // pred_fallthru
          _
        // Predicated region
        $region25: #{tpu_custom_call.1} parent=11 // pred_check
          %p223 = pneg %p152
        $region26: #{tpu_custom_call.1} parent=11 // pred_check_branch
          %225 = sbr.rel (%p223) target = $region28
        $region27: #{tpu_custom_call.1} parent=11 // pred_region
          _
        $region28: #{tpu_custom_call.1} parent=11 // pred_fallthru
          _
        // Predicated region
        $region29: #{tpu_custom_call.1} parent=11 // pred_check
          %p226 = pneg %p173
        $region30: #{tpu_custom_call.1} parent=11 // pred_check_branch
          %228 = sbr.rel (%p226) target = $region32
        $region31: #{tpu_custom_call.1} parent=11 // pred_region
          _
        $region32: #{tpu_custom_call.1} parent=11 // pred_fallthru
          _
      $region12: #{tpu_custom_call.1} parent=5 // pred_fallthru
        _
      %p229 = scmp.lt.s32.totalorder %s16, 2
      // Predicated region
      $region33: #{tpu_custom_call.1} parent=5 // pred_check
        %p230 = pneg %p229
      $region34: #{tpu_custom_call.1} parent=5 // pred_check_branch
        %232 = sbr.rel (%p230) target = $region36
      $region35: #{tpu_custom_call.1} parent=5 // pred_region
        // Predicated region
        $region37: #{tpu_custom_call.1} parent=35 // pred_check
          %p233 = pneg %p36
        $region38: #{tpu_custom_call.1} parent=35 // pred_check_branch
          %235 = sbr.rel (%p233) target = $region40
        $region39: #{tpu_custom_call.1} parent=35 // pred_region
          %s236 = smul.u32 8, %s16
          %p237 = scmp.lt.s32.totalorder %s236, 15
          %s238 = scalar_select %p237, %s236, 15
          %s239 = smul.addr %s238, 8
          %s240 = scalar_lea.vmem %s0, %s239
          %s241 = smul.u32 8, %s16
        $region40: #{tpu_custom_call.1} parent=35 // pred_fallthru
          _
        // Predicated region
        $region41: #{tpu_custom_call.1} parent=35 // pred_check
          %p242 = pneg %p62
        $region42: #{tpu_custom_call.1} parent=35 // pred_check_branch
          %244 = sbr.rel (%p242) target = $region44
        $region43: #{tpu_custom_call.1} parent=35 // pred_region
          %s245 = smul.u32 8, %s16
          %p246 = scmp.lt.s32.totalorder %s245, 15
          %s247 = scalar_select %p246, %s245, 15
          %s248 = smul.addr %s247, 8
          %s249 = scalar_lea.vmem %s1, %s248
          %s250 = smul.u32 8, %s16
        $region44: #{tpu_custom_call.1} parent=35 // pred_fallthru
          _
      $region36: #{tpu_custom_call.1} parent=5 // pred_fallthru
        _
      %p251 = scmp.le.s32.totalorder 1, %s16
      %p252 = scmp.lt.s32.totalorder %s16, 3
      %p253 = pnand %p251, %p252
      %p254 = pneg %p253
      // Predicated region
      $region45: #{tpu_custom_call.1} parent=5 // pred_check
        _
      $region46: #{tpu_custom_call.1} parent=5 // pred_check_branch
        %256 = sbr.rel (%p253) target = $region48
      $region47: #{tpu_custom_call.1} parent=5 // pred_region
        %s257 = ssub.s32 %s16, 1
        %s258 = smul.u32 8, %s21
        %p259 = scmp.lt.s32.totalorder %s258, 15
        %s260 = scalar_select %p259, %s258, 15
        %s261 = smul.addr %s260, 8
        %s262 = scalar_lea.vmem %s0, %s261
        %p263 = pneg %p42
        %p264 = pneg %p39
        %s265 = smul.u32 8, %s21
        %p266 = scmp.lt.s32.totalorder %s265, 15
        %s267 = scalar_select %p266, %s265, 15
        %s268 = smul.addr %s267, 8
        %s269 = scalar_lea.vmem %s1, %s268
        %p270 = pneg %p68
        %p271 = pneg %p65
        %p272 = pneg %p89
        %p273 = pneg %p86
        %p274 = pneg %p110
        %p275 = pneg %p107
        %p276 = pneg %p131
        %p277 = pneg %p128
        %p278 = pneg %p152
        %p279 = pneg %p149
        %p280 = pneg %p173
        %p281 = pneg %p170
        %p282 = pneg %p199
        %p283 = pneg %p196
        %s284 = sand.u32 %s186, 1
        %s285 = scalar_lea.sflag [#allocation3], %s284
        %s286 = sand.u32 %s186, 1
        %s287 = smul.addr %s286, 64
        %s288 = scalar_lea.vmem [#allocation2], %s287
        %s289 = smul.u32 8, %s21
        %p290 = scmp.lt.s32.totalorder %s289, 15
        %s291 = scalar_select %p290, %s289, 15
        %s292 = smul.addr %s291, 8
        %s293 = scalar_lea.vmem %s0, %s292
        %s294 = smul.u32 8, %s21
        %s295 = smul.u32 8, %s21
        %p296 = scmp.lt.s32.totalorder %s295, 15
        %s297 = scalar_select %p296, %s295, 15
        %s298 = smul.addr %s297, 8
        %s299 = scalar_lea.vmem %s1, %s298
        %s300 = smul.u32 8, %s21
        %s301 = smul.u32 8, %s21
        %v303 = vld [vmem:[%s293] sm:$0xff]
        %v304 = vld [vmem:[%s293 + $0x8] sm:$0xff]
        %v305 = vld [vmem:[%s293 + $0x10] sm:$0xff]
        %v306 = vld [vmem:[%s293 + $0x18] sm:$0xff]
        %v307 = vld [vmem:[%s293 + $0x20] sm:$0xff]
        %v308 = vld [vmem:[%s293 + $0x28] sm:$0xff]
        %v309 = vld [vmem:[%s293 + $0x30] sm:$0xff]
        %v310 = vld [vmem:[%s293 + $0x38] sm:$0xff]
        %v311 = vpack.c.bf16 %v304, %v303
        %v312 = vpack.c.bf16 %v306, %v305
        %v313 = vpack.c.bf16 %v308, %v307
        %v314 = vpack.c.bf16 %v310, %v309
        %v315 = vld [vmem:[%s299] sm:$0xff]
        %v316 = vld [vmem:[%s299 + $0x8] sm:$0xff]
        %v317 = vld [vmem:[%s299 + $0x10] sm:$0xff]
        %v318 = vld [vmem:[%s299 + $0x18] sm:$0xff]
        %v319 = vld [vmem:[%s299 + $0x20] sm:$0xff]
        %v320 = vld [vmem:[%s299 + $0x28] sm:$0xff]
        %v321 = vld [vmem:[%s299 + $0x30] sm:$0xff]
        %v322 = vld [vmem:[%s299 + $0x38] sm:$0xff]
        %v323 = vpack.c.bf16 %v316, %v315
        %v324 = vpack.c.bf16 %v318, %v317
        %v325 = vpack.c.bf16 %v320, %v319
        %v326 = vpack.c.bf16 %v322, %v321
        %v327 = vld [vmem:[%s6] sm:$0x3]
        %v328 = vld [vmem:[%s6 + $0x2] sm:$0x1]
        %v329 = vld [vmem:[%s6 + $0x3] sm:$0x1]
        %v330 = vld [vmem:[%s2] sm:$0xff]
        %v331 = vld [vmem:[%s2 + $0x8] sm:$0xff]
        %v332 = vld [vmem:[%s2 + $0x10] sm:$0xff]
        %v333 = vld [vmem:[%s2 + $0x18] sm:$0xff]
        %v334 = vld [vmem:[%s2 + $0x20] sm:$0xff]
        %v335 = vld [vmem:[%s2 + $0x28] sm:$0xff]
        %v336 = vld [vmem:[%s2 + $0x30] sm:$0xff]
        %v337 = vld [vmem:[%s2 + $0x38] sm:$0xff]
        %v338 = vld [vmem:[%s2 + $0x40] sm:$0xff]
        %v339 = vld [vmem:[%s2 + $0x48] sm:$0xff]
        %v340 = vld [vmem:[%s2 + $0x50] sm:$0xff]
        %v341 = vld [vmem:[%s2 + $0x58] sm:$0xff]
        %v342 = vld [vmem:[%s2 + $0x60] sm:$0x33]
        %v343 = vld [vmem:[%s3] sm:$0xf]
        %345 = vst [vmem:[#allocation1] ss:$4 sm:$0xff] %v343
        %v346 = vld.sshfl [vmem:[#allocation1] sm:$0xff pattern:$0x73625140]
        %v347 = vld.sshfl [vmem:[#allocation1 + $0x8] sm:$0xff pattern:$0x73625140]
        %vm348 = vcmask 23552
        %v350 = vsel %vm348, %v323, 0
        %v353 = vsel %vm348, %v324, 0
        %v356 = vsel %vm348, %v325, 0
        %v359 = vsel %vm348, %v326, 0
        %vm361 = vcmask 1040384
        %vm362 = vcmask 1041408
        %v363 = vsel %vm361, 4294967295, 65535
        %v364 = vsel %vm362, %v363, 0
        %v365 = vand.u32 %v346, %v364
        %v367 = vand.u32 %v347, %v364
        %369 = vmatpush.bf16.msra.mxu0 0
        %370 = vmatpush.bf16.msra.mxu0 0
        %371 = vmatpush.bf16.msra.mxu0 0
        %372 = vmatpush.bf16.msra.mxu0 0
        %373 = vmatpush.bf16.msra.mxu0 0
        %374 = vmatpush.bf16.msra.mxu0 0
        %375 = vmatpush.bf16.msra.mxu0 0
        %376 = vmatpush.bf16.msra.mxu0 %v365
        %377 = vmatmul.bf16.gmra.mxu0 %v350
        %v378 = vpop.f32.mrf.mxu0
        %v379 = vadd.f32 0.0, %v378
        %v380 = vpop.f32.mrf.mxu0
        %v381 = vadd.f32 0.0, %v380
        %382 = vmatmul.bf16.gmra.mxu0 %v353
        %v383 = vpop.f32.mrf.mxu0
        %v384 = vadd.f32 0.0, %v383
        %v385 = vpop.f32.mrf.mxu0
        %v386 = vadd.f32 0.0, %v385
        %387 = vmatmul.bf16.gmra.mxu0 %v356
        %v388 = vpop.f32.mrf.mxu0
        %v389 = vadd.f32 0.0, %v388
        %v390 = vpop.f32.mrf.mxu0
        %v391 = vadd.f32 0.0, %v390
        %392 = vmatmul.bf16.gmra.mxu0 %v359
        %v393 = vpop.f32.mrf.mxu0
        %v394 = vadd.f32 0.0, %v393
        %v395 = vpop.f32.mrf.mxu0
        %v396 = vadd.f32 0.0, %v395
        %397 = vdwg.mxu0
        %398 = vmatpush.bf16.msra.mxu0 0
        %399 = vmatpush.bf16.msra.mxu0 0
        %400 = vmatpush.bf16.msra.mxu0 0
        %401 = vmatpush.bf16.msra.mxu0 0
        %402 = vmatpush.bf16.msra.mxu0 0
        %403 = vmatpush.bf16.msra.mxu0 0
        %404 = vmatpush.bf16.msra.mxu0 0
        %405 = vmatpush.bf16.msra.mxu0 %v367
        %406 = vmatmul.bf16.gmra.mxu0 %v350
        %v407 = vpop.f32.mrf.mxu0
        %v408 = vadd.f32 0.0, %v407
        %v409 = vpop.f32.mrf.mxu0
        %v410 = vadd.f32 0.0, %v409
        %411 = vmatmul.bf16.gmra.mxu0 %v353
        %v412 = vpop.f32.mrf.mxu0
        %v413 = vadd.f32 0.0, %v412
        %v414 = vpop.f32.mrf.mxu0
        %v415 = vadd.f32 0.0, %v414
        %416 = vmatmul.bf16.gmra.mxu0 %v356
        %v417 = vpop.f32.mrf.mxu0
        %v418 = vadd.f32 0.0, %v417
        %v419 = vpop.f32.mrf.mxu0
        %v420 = vadd.f32 0.0, %v419
        %421 = vmatmul.bf16.gmra.mxu0 %v359
        %v422 = vpop.f32.mrf.mxu0
        %v423 = vadd.f32 0.0, %v422
        %v424 = vpop.f32.mrf.mxu0
        %v425 = vadd.f32 0.0, %v424
        %426 = vdwg.mxu0
        %v440 = vunpack.c.l.b16 %v330
        %v441 = vunpack.c.h.b16 %v330
        %v442 = vunpack.c.l.b16 %v331
        %v443 = vunpack.c.h.b16 %v331
        %v444 = vunpack.c.l.b16 %v332
        %v445 = vunpack.c.h.b16 %v332
        %v446 = vunpack.c.l.b16 %v333
        %v447 = vunpack.c.h.b16 %v333
        %v448 = vunpack.c.l.b16 %v334
        %v449 = vunpack.c.h.b16 %v334
        %v450 = vunpack.c.l.b16 %v335
        %v451 = vunpack.c.h.b16 %v335
        %v452 = vunpack.c.l.b16 %v336
        %v453 = vunpack.c.h.b16 %v336
        %v454 = vunpack.c.l.b16 %v337
        %v455 = vunpack.c.h.b16 %v337
        %v456 = vunpack.c.l.b16 %v338
        %v457 = vunpack.c.h.b16 %v338
        %v458 = vunpack.c.l.b16 %v339
        %v459 = vunpack.c.h.b16 %v339
        %v460 = vunpack.c.l.b16 %v340
        %v461 = vunpack.c.h.b16 %v340
        %v462 = vunpack.c.l.b16 %v341
        %v463 = vunpack.c.h.b16 %v341
        %v464 = vunpack.c.l.b16 %v342
        %v465 = vunpack.c.h.b16 %v342
        %v466 = vpack.c.b16 %v442, %v440
        %v467 = vpack.c.b16 %v443, %v441
        %v468 = vpack.c.b16 %v446, %v444
        %v469 = vpack.c.b16 %v447, %v445
        %v470 = vpack.c.b16 %v450, %v448
        %v471 = vpack.c.b16 %v451, %v449
        %v472 = vpack.c.b16 %v454, %v452
        %v473 = vpack.c.b16 %v455, %v453
        %v474 = vpack.c.b16 %v458, %v456
        %v475 = vpack.c.b16 %v459, %v457
        %v476 = vpack.c.b16 %v462, %v460
        %v477 = vpack.c.b16 %v463, %v461
        %v478 = vpack.c.b16 %v464, %v464
        %v479 = vpack.c.b16 %v465, %v465
        %vm492 = vcmask 818176
        %v494 = vsel %vm492, %v311, 0
        %v497 = vsel %vm492, %v312, 0
        %v500 = vsel %vm492, %v313, 0
        %v503 = vsel %vm492, %v314, 0
        %v506 = vsel %vm362, %v478, 0
        %v509 = vsel %vm362, %v479, 0
        %511 = vmatpush.bf16.msra.mxu0 0
        %512 = vmatpush.bf16.msra.mxu0 %v506
        %513 = vmatpush.bf16.msra.mxu0 %v476
        %514 = vmatpush.bf16.msra.mxu0 %v474
        %515 = vmatpush.bf16.msra.mxu0 %v472
        %516 = vmatpush.bf16.msra.mxu0 %v470
        %517 = vmatpush.bf16.msra.mxu0 %v468
        %518 = vmatpush.bf16.msra.mxu0 %v466
        %519 = vmatmul.bf16.gmra.mxu0 %v494
        %v520 = vpop.f32.mrf.mxu0
        %v521 = vadd.f32 %v379, %v520
        %v522 = vpop.f32.mrf.mxu0
        %v523 = vadd.f32 %v381, %v522
        %524 = vmatmul.bf16.gmra.mxu0 %v497
        %v525 = vpop.f32.mrf.mxu0
        %v526 = vadd.f32 %v384, %v525
        %v527 = vpop.f32.mrf.mxu0
        %v528 = vadd.f32 %v386, %v527
        %529 = vmatmul.bf16.gmra.mxu0 %v500
        %v530 = vpop.f32.mrf.mxu0
        %v531 = vadd.f32 %v389, %v530
        %v532 = vpop.f32.mrf.mxu0
        %v533 = vadd.f32 %v391, %v532
        %534 = vmatmul.bf16.gmra.mxu0 %v503
        %v535 = vpop.f32.mrf.mxu0
        %v536 = vadd.f32 %v394, %v535
        %v537 = vpop.f32.mrf.mxu0
        %v538 = vadd.f32 %v396, %v537
        %539 = vdwg.mxu0
        %540 = vmatpush.bf16.msra.mxu0 0
        %541 = vmatpush.bf16.msra.mxu0 %v509
        %542 = vmatpush.bf16.msra.mxu0 %v477
        %543 = vmatpush.bf16.msra.mxu0 %v475
        %544 = vmatpush.bf16.msra.mxu0 %v473
        %545 = vmatpush.bf16.msra.mxu0 %v471
        %546 = vmatpush.bf16.msra.mxu0 %v469
        %547 = vmatpush.bf16.msra.mxu0 %v467
        %548 = vmatmul.bf16.gmra.mxu0 %v494
        %v549 = vpop.f32.mrf.mxu0
        %v550 = vadd.f32 %v408, %v549
        %v551 = vpop.f32.mrf.mxu0
        %v552 = vadd.f32 %v410, %v551
        %553 = vmatmul.bf16.gmra.mxu0 %v497
        %v554 = vpop.f32.mrf.mxu0
        %v555 = vadd.f32 %v413, %v554
        %v556 = vpop.f32.mrf.mxu0
        %v557 = vadd.f32 %v415, %v556
        %558 = vmatmul.bf16.gmra.mxu0 %v500
        %v559 = vpop.f32.mrf.mxu0
        %v560 = vadd.f32 %v418, %v559
        %v561 = vpop.f32.mrf.mxu0
        %v562 = vadd.f32 %v420, %v561
        %563 = vmatmul.bf16.gmra.mxu0 %v503
        %v564 = vpop.f32.mrf.mxu0
        %v565 = vadd.f32 %v423, %v564
        %v566 = vpop.f32.mrf.mxu0
        %v567 = vadd.f32 %v425, %v566
        %568 = vdwg.mxu0
        %v570 = vperm.slane %v327, 0
        %v571 = vperm.slane %v327, 1
        %v574 = vadd.f32 %v521, %v570
        %v575 = vadd.f32 %v550, %v571
        %v576 = vadd.f32 %v523, %v570
        %v577 = vadd.f32 %v552, %v571
        %v578 = vadd.f32 %v526, %v570
        %v579 = vadd.f32 %v555, %v571
        %v580 = vadd.f32 %v528, %v570
        %v581 = vadd.f32 %v557, %v571
        %v582 = vadd.f32 %v531, %v570
        %v583 = vadd.f32 %v560, %v571
        %v584 = vadd.f32 %v533, %v570
        %v585 = vadd.f32 %v562, %v571
        %v586 = vadd.f32 %v536, %v570
        %v587 = vadd.f32 %v565, %v571
        %v588 = vadd.f32 %v538, %v570
        %v589 = vadd.f32 %v567, %v571
        %v590 = vmax.f32 %v574, 0.0
        %v591 = vmax.f32 %v575, 0.0
        %v592 = vmax.f32 %v576, 0.0
        %v593 = vmax.f32 %v577, 0.0
        %v594 = vmax.f32 %v578, 0.0
        %v595 = vmax.f32 %v579, 0.0
        %v596 = vmax.f32 %v580, 0.0
        %v597 = vmax.f32 %v581, 0.0
        %v598 = vmax.f32 %v582, 0.0
        %v599 = vmax.f32 %v583, 0.0
        %v600 = vmax.f32 %v584, 0.0
        %v601 = vmax.f32 %v585, 0.0
        %v602 = vmax.f32 %v586, 0.0
        %v603 = vmax.f32 %v587, 0.0
        %v604 = vmax.f32 %v588, 0.0
        %v605 = vmax.f32 %v589, 0.0
        %v606 = vpack.c.bf16 %v592, %v590
        %v607 = vpack.c.bf16 %v593, %v591
        %v608 = vpack.c.bf16 %v596, %v594
        %v609 = vpack.c.bf16 %v597, %v595
        %v610 = vpack.c.bf16 %v600, %v598
        %v611 = vpack.c.bf16 %v601, %v599
        %v612 = vpack.c.bf16 %v604, %v602
        %v613 = vpack.c.bf16 %v605, %v603
        %v614 = vld [vmem:[%s4] sm:$0xf]
        %v615 = vld [vmem:[%s4 + $0x4] sm:$0xf]
        %v616 = vld [vmem:[%s4 + $0x8] sm:$0xf]
        %v617 = vld [vmem:[%s4 + $0xc] sm:$0xf]
        %v618 = vld [vmem:[%s4 + $0x10] sm:$0xf]
        %v619 = vld [vmem:[%s4 + $0x14] sm:$0xf]
        %v620 = vld [vmem:[%s4 + $0x18] sm:$0xf]
        %v621 = vld [vmem:[%s4 + $0x1c] sm:$0xf]
        %v622 = vld [vmem:[%s4 + $0x20] sm:$0xf]
        %v623 = vld [vmem:[%s4 + $0x24] sm:$0xf]
        %v624 = vld [vmem:[%s4 + $0x28] sm:$0xf]
        %v625 = vld [vmem:[%s4 + $0x2c] sm:$0xf]
        %v626 = vld [vmem:[%s4 + $0x30] sm:$0xf]
        %v627 = vld [vmem:[%s4 + $0x34] sm:$0xf]
        %v628 = vld [vmem:[%s4 + $0x38] sm:$0xf]
        %v629 = vld [vmem:[%s4 + $0x3c] sm:$0xf]
        %v630 = vld [vmem:[%s4 + $0x40] sm:$0xf]
        %v631 = vld [vmem:[%s4 + $0x44] sm:$0xf]
        %v632 = vld [vmem:[%s4 + $0x48] sm:$0xf]
        %v633 = vld [vmem:[%s4 + $0x4c] sm:$0xf]
        %v634 = vld [vmem:[%s4 + $0x50] sm:$0xf]
        %v635 = vld [vmem:[%s4 + $0x54] sm:$0xf]
        %v636 = vld [vmem:[%s4 + $0x58] sm:$0xf]
        %v637 = vld [vmem:[%s4 + $0x5c] sm:$0xf]
        %v638 = vld [vmem:[%s4 + $0x60] sm:$0xf]
        %v639 = vld [vmem:[%s4 + $0x64] sm:$0xf]
        %v640 = vld [vmem:[%s4 + $0x68] sm:$0xf]
        %v641 = vld [vmem:[%s4 + $0x6c] sm:$0xf]
        %v642 = vld [vmem:[%s4 + $0x70] sm:$0xf]
        %v643 = vld [vmem:[%s4 + $0x74] sm:$0xf]
        %v644 = vld [vmem:[%s4 + $0x78] sm:$0xf]
        %v645 = vld [vmem:[%s4 + $0x7c] sm:$0xf]
        %v647 = vperm.slane %v328, 0
        %v681 = vunpack.c.l.b16 %v614
        %v682 = vunpack.c.l.b16 %v615
        %v683 = vunpack.c.l.b16 %v616
        %v684 = vunpack.c.l.b16 %v617
        %v685 = vunpack.c.l.b16 %v618
        %v686 = vunpack.c.l.b16 %v619
        %v687 = vunpack.c.l.b16 %v620
        %v688 = vunpack.c.l.b16 %v621
        %v689 = vunpack.c.l.b16 %v622
        %v690 = vunpack.c.l.b16 %v623
        %v691 = vunpack.c.l.b16 %v624
        %v692 = vunpack.c.l.b16 %v625
        %v693 = vunpack.c.l.b16 %v626
        %v694 = vunpack.c.l.b16 %v627
        %v695 = vunpack.c.l.b16 %v628
        %v696 = vunpack.c.l.b16 %v629
        %v697 = vunpack.c.l.b16 %v630
        %v698 = vunpack.c.l.b16 %v631
        %v699 = vunpack.c.l.b16 %v632
        %v700 = vunpack.c.l.b16 %v633
        %v701 = vunpack.c.l.b16 %v634
        %v702 = vunpack.c.l.b16 %v635
        %v703 = vunpack.c.l.b16 %v636
        %v704 = vunpack.c.l.b16 %v637
        %v705 = vunpack.c.l.b16 %v638
        %v706 = vunpack.c.l.b16 %v639
        %v707 = vunpack.c.l.b16 %v640
        %v708 = vunpack.c.l.b16 %v641
        %v709 = vunpack.c.l.b16 %v642
        %v710 = vunpack.c.l.b16 %v643
        %v711 = vunpack.c.l.b16 %v644
        %v712 = vunpack.c.l.b16 %v645
        %v713 = vpack.c.b16 %v682, %v681
        %v714 = vpack.c.b16 %v684, %v683
        %v715 = vpack.c.b16 %v686, %v685
        %v716 = vpack.c.b16 %v688, %v687
        %v717 = vpack.c.b16 %v690, %v689
        %v718 = vpack.c.b16 %v692, %v691
        %v719 = vpack.c.b16 %v694, %v693
        %v720 = vpack.c.b16 %v696, %v695
        %v721 = vpack.c.b16 %v698, %v697
        %v722 = vpack.c.b16 %v700, %v699
        %v723 = vpack.c.b16 %v702, %v701
        %v724 = vpack.c.b16 %v704, %v703
        %v725 = vpack.c.b16 %v706, %v705
        %v726 = vpack.c.b16 %v708, %v707
        %v727 = vpack.c.b16 %v710, %v709
        %v728 = vpack.c.b16 %v712, %v711
        %745 = vmatpush.bf16.msra.mxu0 %v720
        %746 = vmatpush.bf16.msra.mxu0 %v719
        %747 = vmatpush.bf16.msra.mxu0 %v718
        %748 = vmatpush.bf16.msra.mxu0 %v717
        %749 = vmatpush.bf16.msra.mxu0 %v716
        %750 = vmatpush.bf16.msra.mxu0 %v715
        %751 = vmatpush.bf16.msra.mxu0 %v714
        %752 = vmatpush.bf16.msra.mxu0 %v713
        %753 = vmatmul.bf16.gmra.mxu0 %v606
        %v754 = vpop.f32.mrf.mxu0
        %v755 = vadd.f32 %v647, %v754
        %v756 = vpop.f32.mrf.mxu0
        %v757 = vadd.f32 %v647, %v756
        %758 = vmatmul.bf16.gmra.mxu0 %v608
        %v759 = vpop.f32.mrf.mxu0
        %v760 = vadd.f32 %v647, %v759
        %v761 = vpop.f32.mrf.mxu0
        %v762 = vadd.f32 %v647, %v761
        %763 = vmatmul.bf16.gmra.mxu0 %v610
        %v764 = vpop.f32.mrf.mxu0
        %v765 = vadd.f32 %v647, %v764
        %v766 = vpop.f32.mrf.mxu0
        %v767 = vadd.f32 %v647, %v766
        %768 = vmatmul.bf16.gmra.mxu0 %v612
        %v769 = vpop.f32.mrf.mxu0
        %v770 = vadd.f32 %v647, %v769
        %v771 = vpop.f32.mrf.mxu0
        %v772 = vadd.f32 %v647, %v771
        %773 = vdwg.mxu0
        %774 = vmatpush.bf16.msra.mxu0 %v728
        %775 = vmatpush.bf16.msra.mxu0 %v727
        %776 = vmatpush.bf16.msra.mxu0 %v726
        %777 = vmatpush.bf16.msra.mxu0 %v725
        %778 = vmatpush.bf16.msra.mxu0 %v724
        %779 = vmatpush.bf16.msra.mxu0 %v723
        %780 = vmatpush.bf16.msra.mxu0 %v722
        %781 = vmatpush.bf16.msra.mxu0 %v721
        %782 = vmatmul.bf16.gmra.mxu0 %v607
        %v783 = vpop.f32.mrf.mxu0
        %v784 = vadd.f32 %v755, %v783
        %v785 = vpop.f32.mrf.mxu0
        %v786 = vadd.f32 %v757, %v785
        %787 = vmatmul.bf16.gmra.mxu0 %v609
        %v788 = vpop.f32.mrf.mxu0
        %v789 = vadd.f32 %v760, %v788
        %v790 = vpop.f32.mrf.mxu0
        %v791 = vadd.f32 %v762, %v790
        %792 = vmatmul.bf16.gmra.mxu0 %v611
        %v793 = vpop.f32.mrf.mxu0
        %v794 = vadd.f32 %v765, %v793
        %v795 = vpop.f32.mrf.mxu0
        %v796 = vadd.f32 %v767, %v795
        %797 = vmatmul.bf16.gmra.mxu0 %v613
        %v798 = vpop.f32.mrf.mxu0
        %v799 = vadd.f32 %v770, %v798
        %v800 = vpop.f32.mrf.mxu0
        %v801 = vadd.f32 %v772, %v800
        %802 = vdwg.mxu0
        %v803 = vmax.f32 %v784, 0.0
        %v804 = vmax.f32 %v786, 0.0
        %v805 = vmax.f32 %v789, 0.0
        %v806 = vmax.f32 %v791, 0.0
        %v807 = vmax.f32 %v794, 0.0
        %v808 = vmax.f32 %v796, 0.0
        %v809 = vmax.f32 %v799, 0.0
        %v810 = vmax.f32 %v801, 0.0
        %v811 = vpack.c.bf16 %v804, %v803
        %v812 = vpack.c.bf16 %v806, %v805
        %v813 = vpack.c.bf16 %v808, %v807
        %v814 = vpack.c.bf16 %v810, %v809
        %v815 = vld [vmem:[%s5] sm:$0xf]
        %v816 = vld [vmem:[%s5 + $0x4] sm:$0xf]
        %v817 = vld [vmem:[%s5 + $0x8] sm:$0xf]
        %v818 = vld [vmem:[%s5 + $0xc] sm:$0xf]
        %v819 = vld [vmem:[%s5 + $0x10] sm:$0xf]
        %v820 = vld [vmem:[%s5 + $0x14] sm:$0xf]
        %v821 = vld [vmem:[%s5 + $0x18] sm:$0xf]
        %v822 = vld [vmem:[%s5 + $0x1c] sm:$0xf]
        %v823 = vld [vmem:[%s5 + $0x20] sm:$0xf]
        %v824 = vld [vmem:[%s5 + $0x24] sm:$0xf]
        %v825 = vld [vmem:[%s5 + $0x28] sm:$0xf]
        %v826 = vld [vmem:[%s5 + $0x2c] sm:$0xf]
        %v827 = vld [vmem:[%s5 + $0x30] sm:$0xf]
        %v828 = vld [vmem:[%s5 + $0x34] sm:$0xf]
        %v829 = vld [vmem:[%s5 + $0x38] sm:$0xf]
        %v830 = vld [vmem:[%s5 + $0x3c] sm:$0xf]
        %v832 = vperm.slane %v329, 0
        %v850 = vunpack.c.l.b16 %v815
        %v851 = vunpack.c.l.b16 %v816
        %v852 = vunpack.c.l.b16 %v817
        %v853 = vunpack.c.l.b16 %v818
        %v854 = vunpack.c.l.b16 %v819
        %v855 = vunpack.c.l.b16 %v820
        %v856 = vunpack.c.l.b16 %v821
        %v857 = vunpack.c.l.b16 %v822
        %v858 = vunpack.c.l.b16 %v823
        %v859 = vunpack.c.l.b16 %v824
        %v860 = vunpack.c.l.b16 %v825
        %v861 = vunpack.c.l.b16 %v826
        %v862 = vunpack.c.l.b16 %v827
        %v863 = vunpack.c.l.b16 %v828
        %v864 = vunpack.c.l.b16 %v829
        %v865 = vunpack.c.l.b16 %v830
        %v866 = vpack.c.b16 %v851, %v850
        %v867 = vpack.c.b16 %v853, %v852
        %v868 = vpack.c.b16 %v855, %v854
        %v869 = vpack.c.b16 %v857, %v856
        %v870 = vpack.c.b16 %v859, %v858
        %v871 = vpack.c.b16 %v861, %v860
        %v872 = vpack.c.b16 %v863, %v862
        %v873 = vpack.c.b16 %v865, %v864
        %882 = vmatpush.bf16.msra.mxu0 %v873
        %883 = vmatpush.bf16.msra.mxu0 %v872
        %884 = vmatpush.bf16.msra.mxu0 %v871
        %885 = vmatpush.bf16.msra.mxu0 %v870
        %886 = vmatpush.bf16.msra.mxu0 %v869
        %887 = vmatpush.bf16.msra.mxu0 %v868
        %888 = vmatpush.bf16.msra.mxu0 %v867
        %889 = vmatpush.bf16.msra.mxu0 %v866
        %890 = vmatmul.bf16.gmra.mxu0 %v811
        %v891 = vpop.f32.mrf.mxu0
        %v892 = vadd.f32 %v832, %v891
        %v893 = vpop.f32.mrf.mxu0
        %v894 = vadd.f32 %v832, %v893
        %895 = vmatmul.bf16.gmra.mxu0 %v812
        %v896 = vpop.f32.mrf.mxu0
        %v897 = vadd.f32 %v832, %v896
        %v898 = vpop.f32.mrf.mxu0
        %v899 = vadd.f32 %v832, %v898
        %900 = vmatmul.bf16.gmra.mxu0 %v813
        %v901 = vpop.f32.mrf.mxu0
        %v902 = vadd.f32 %v832, %v901
        %v903 = vpop.f32.mrf.mxu0
        %v904 = vadd.f32 %v832, %v903
        %905 = vmatmul.bf16.gmra.mxu0 %v814
        %v906 = vpop.f32.mrf.mxu0
        %v907 = vadd.f32 %v832, %v906
        %v908 = vpop.f32.mrf.mxu0
        %v909 = vadd.f32 %v832, %v908
        %910 = vdwg.mxu0
        %v911 = vxor.u32 %v892, 2147483648
        %v912 = vxor.u32 %v894, 2147483648
        %v913 = vxor.u32 %v897, 2147483648
        %v914 = vxor.u32 %v899, 2147483648
        %v915 = vxor.u32 %v902, 2147483648
        %v916 = vxor.u32 %v904, 2147483648
        %v917 = vxor.u32 %v907, 2147483648
        %v918 = vxor.u32 %v909, 2147483648
        %v919 = vmul.f32 %v911, 1.442695
        %v920 = vpow.pop %v919
        %v921 = vmul.f32 %v912, 1.442695
        %v922 = vpow.pop %v921
        %v923 = vmul.f32 %v913, 1.442695
        %v924 = vpow.pop %v923
        %v925 = vmul.f32 %v914, 1.442695
        %v926 = vpow.pop %v925
        %v927 = vmul.f32 %v915, 1.442695
        %v928 = vpow.pop %v927
        %v929 = vmul.f32 %v916, 1.442695
        %v930 = vpow.pop %v929
        %v931 = vmul.f32 %v917, 1.442695
        %v932 = vpow.pop %v931
        %v933 = vmul.f32 %v918, 1.442695
        %v934 = vpow.pop %v933
        %v935 = vadd.f32 %v920, 1.0
        %v936 = vadd.f32 %v922, 1.0
        %v937 = vadd.f32 %v924, 1.0
        %v938 = vadd.f32 %v926, 1.0
        %v939 = vadd.f32 %v928, 1.0
        %v940 = vadd.f32 %v930, 1.0
        %v941 = vadd.f32 %v932, 1.0
        %v942 = vadd.f32 %v934, 1.0
        %v943 = vrcp.pop %v935
        %v944 = vmul.f32 %v935, %v943
        %v945 = vsub.f32 1.0, %v944
        %v946 = vmul.f32 %v943, %v945
        %v947 = vadd.f32 %v943, %v946
        %vm948 = vweird.f32 %v935
        %vm949 = vweird.f32 %v943
        %vm950 = vmor %vm948, %vm949
        %v951 = vsel %vm950, %v943, %v947
        %v952 = vand.u32 2147483647, %v935
        %vm953 = vcmp.eq.f32.partialorder %v952, 8.507059e+37
        %v954 = vand.u32 %v935, 2147483648
        %v955 = vor.u32 1.1754944e-38, %v954
        %v956 = vsel %vm953, %v955, %v951
        %v957 = vmul.f32 1.0, %v956
        %v958 = vrcp.pop %v936
        %v959 = vmul.f32 %v936, %v958
        %v960 = vsub.f32 1.0, %v959
        %v961 = vmul.f32 %v958, %v960
        %v962 = vadd.f32 %v958, %v961
        %vm963 = vweird.f32 %v936
        %vm964 = vweird.f32 %v958
        %vm965 = vmor %vm963, %vm964
        %v966 = vsel %vm965, %v958, %v962
        %v967 = vand.u32 2147483647, %v936
        %vm968 = vcmp.eq.f32.partialorder %v967, 8.507059e+37
        %v969 = vand.u32 %v936, 2147483648
        %v970 = vor.u32 1.1754944e-38, %v969
        %v971 = vsel %vm968, %v970, %v966
        %v972 = vmul.f32 1.0, %v971
        %v973 = vrcp.pop %v937
        %v974 = vmul.f32 %v937, %v973
        %v975 = vsub.f32 1.0, %v974
        %v976 = vmul.f32 %v973, %v975
        %v977 = vadd.f32 %v973, %v976
        %vm978 = vweird.f32 %v937
        %vm979 = vweird.f32 %v973
        %vm980 = vmor %vm978, %vm979
        %v981 = vsel %vm980, %v973, %v977
        %v982 = vand.u32 2147483647, %v937
        %vm983 = vcmp.eq.f32.partialorder %v982, 8.507059e+37
        %v984 = vand.u32 %v937, 2147483648
        %v985 = vor.u32 1.1754944e-38, %v984
        %v986 = vsel %vm983, %v985, %v981
        %v987 = vmul.f32 1.0, %v986
        %v988 = vrcp.pop %v938
        %v989 = vmul.f32 %v938, %v988
        %v990 = vsub.f32 1.0, %v989
        %v991 = vmul.f32 %v988, %v990
        %v992 = vadd.f32 %v988, %v991
        %vm993 = vweird.f32 %v938
        %vm994 = vweird.f32 %v988
        %vm995 = vmor %vm993, %vm994
        %v996 = vsel %vm995, %v988, %v992
        %v997 = vand.u32 2147483647, %v938
        %vm998 = vcmp.eq.f32.partialorder %v997, 8.507059e+37
        %v999 = vand.u32 %v938, 2147483648
        %v1000 = vor.u32 1.1754944e-38, %v999
        %v1001 = vsel %vm998, %v1000, %v996
        %v1002 = vmul.f32 1.0, %v1001
        %v1003 = vrcp.pop %v939
        %v1004 = vmul.f32 %v939, %v1003
        %v1005 = vsub.f32 1.0, %v1004
        %v1006 = vmul.f32 %v1003, %v1005
        %v1007 = vadd.f32 %v1003, %v1006
        %vm1008 = vweird.f32 %v939
        %vm1009 = vweird.f32 %v1003
        %vm1010 = vmor %vm1008, %vm1009
        %v1011 = vsel %vm1010, %v1003, %v1007
        %v1012 = vand.u32 2147483647, %v939
        %vm1013 = vcmp.eq.f32.partialorder %v1012, 8.507059e+37
        %v1014 = vand.u32 %v939, 2147483648
        %v1015 = vor.u32 1.1754944e-38, %v1014
        %v1016 = vsel %vm1013, %v1015, %v1011
        %v1017 = vmul.f32 1.0, %v1016
        %v1018 = vrcp.pop %v940
        %v1019 = vmul.f32 %v940, %v1018
        %v1020 = vsub.f32 1.0, %v1019
        %v1021 = vmul.f32 %v1018, %v1020
        %v1022 = vadd.f32 %v1018, %v1021
        %vm1023 = vweird.f32 %v940
        %vm1024 = vweird.f32 %v1018
        %vm1025 = vmor %vm1023, %vm1024
        %v1026 = vsel %vm1025, %v1018, %v1022
        %v1027 = vand.u32 2147483647, %v940
        %vm1028 = vcmp.eq.f32.partialorder %v1027, 8.507059e+37
        %v1029 = vand.u32 %v940, 2147483648
        %v1030 = vor.u32 1.1754944e-38, %v1029
        %v1031 = vsel %vm1028, %v1030, %v1026
        %v1032 = vmul.f32 1.0, %v1031
        %v1033 = vrcp.pop %v941
        %v1034 = vmul.f32 %v941, %v1033
        %v1035 = vsub.f32 1.0, %v1034
        %v1036 = vmul.f32 %v1033, %v1035
        %v1037 = vadd.f32 %v1033, %v1036
        %vm1038 = vweird.f32 %v941
        %vm1039 = vweird.f32 %v1033
        %vm1040 = vmor %vm1038, %vm1039
        %v1041 = vsel %vm1040, %v1033, %v1037
        %v1042 = vand.u32 2147483647, %v941
        %vm1043 = vcmp.eq.f32.partialorder %v1042, 8.507059e+37
        %v1044 = vand.u32 %v941, 2147483648
        %v1045 = vor.u32 1.1754944e-38, %v1044
        %v1046 = vsel %vm1043, %v1045, %v1041
        %v1047 = vmul.f32 1.0, %v1046
        %v1048 = vrcp.pop %v942
        %v1049 = vmul.f32 %v942, %v1048
        %v1050 = vsub.f32 1.0, %v1049
        %v1051 = vmul.f32 %v1048, %v1050
        %v1052 = vadd.f32 %v1048, %v1051
        %vm1053 = vweird.f32 %v942
        %vm1054 = vweird.f32 %v1048
        %vm1055 = vmor %vm1053, %vm1054
        %v1056 = vsel %vm1055, %v1048, %v1052
        %v1057 = vand.u32 2147483647, %v942
        %vm1058 = vcmp.eq.f32.partialorder %v1057, 8.507059e+37
        %v1059 = vand.u32 %v942, 2147483648
        %v1060 = vor.u32 1.1754944e-38, %v1059
        %v1061 = vsel %vm1058, %v1060, %v1056
        %v1062 = vmul.f32 1.0, %v1061
        %1063 = vst [vmem:[%s288] sm:$0xff] %v957
        %1064 = vst [vmem:[%s288 + $0x8] sm:$0xff] %v972
        %1065 = vst [vmem:[%s288 + $0x10] sm:$0xff] %v987
        %1066 = vst [vmem:[%s288 + $0x18] sm:$0xff] %v1002
        %1067 = vst [vmem:[%s288 + $0x20] sm:$0xff] %v1017
        %1068 = vst [vmem:[%s288 + $0x28] sm:$0xff] %v1032
        %1069 = vst [vmem:[%s288 + $0x30] sm:$0xff] %v1047
        %1070 = vst [vmem:[%s288 + $0x38] sm:$0xff] %v1062
        %s1071 = sand.u32 %s186, 1
        %s1072 = scalar_lea.sflag [#allocation3], %s1071
        %s1073 = sand.u32 %s186, 1
        %s1074 = smul.addr %s1073, 64
        %s1075 = scalar_lea.vmem [#allocation2], %s1074
        // Predicated region
        $region49: #{tpu_custom_call.1} parent=47 // pred_check
          %p1076 = pneg %p196
        $region50: #{tpu_custom_call.1} parent=47 // pred_check_branch
          %1078 = sbr.rel (%p1076) target = $region52
        $region51: #{tpu_custom_call.1} parent=47 // pred_region
          %s1079 = smul.u32 8, %s21
          %1081 = vsyncadd %s1072, 0
          %s1082 = smul.addr %s1079, 8
          %s1083 = scalar_lea.hbm %s7, %s1082
          %s1084 = sshll.u32 %s1075, 4
          %s1085 = int_to_ptr.vmem [resolvable:$true] %s1084
          %s1086 = sshll.u32 %s1083, 4
          %s1087 = int_to_ptr.hbm [resolvable:$true] %s1086
          %1092 = dma.vmem_to_hbm [thread:$0]  %s1085, 1024, %s1087, %s1072, 128, 128, 8
        $region52: #{tpu_custom_call.1} parent=47 // pred_fallthru
          _
      $region48: #{tpu_custom_call.1} parent=5 // pred_fallthru
        _
      %p1093 = scmp.le.s32.totalorder 2, %s16
      // Predicated region
      $region53: #{tpu_custom_call.1} parent=5 // pred_check
        %p1094 = pneg %p1093
      $region54: #{tpu_custom_call.1} parent=5 // pred_check_branch
        %1096 = sbr.rel (%p1094) target = $region56
      $region55: #{tpu_custom_call.1} parent=5 // pred_region
        %s1097 = ssub.s32 %s16, 2
        // Predicated region
        $region57: #{tpu_custom_call.1} parent=55 // pred_check
          %p1098 = pneg %p202
        $region58: #{tpu_custom_call.1} parent=55 // pred_check_branch
          %1100 = sbr.rel (%p1098) target = $region60
        $region59: #{tpu_custom_call.1} parent=55 // pred_region
          %s1101 = sand.u32 %s187, 1
          %s1102 = scalar_lea.sflag [#allocation3], %s1101
          %s1103 = sand.u32 %s187, 1
          %s1104 = smul.addr %s1103, 64
          %s1105 = scalar_lea.vmem [#allocation2], %s1104
          %1107 = dma.done %s1102, 1024
        $region60: #{tpu_custom_call.1} parent=55 // pred_fallthru
          _
      $region56: #{tpu_custom_call.1} parent=5 // pred_fallthru
        _
    $region6: #{tpu_custom_call.1} parent=1 // loop_footer
      %s20 = sadd.s32 1, %s16
    $region7: #{tpu_custom_call.1} parent=1 // loop_footer_branch
      %15 = sbr.rel target = $region3
    $region8: #{tpu_custom_call.1} parent=1 // loop_exit
      _
    %1108 = vsyncpa [#allocation3], 1
    %s1109 = scalar_lea.sflag [#allocation3], 1
    %1110 = vsyncpa %s1109, 1

</llo_original>
